<compile_context>
chip_gen: v7x
topology: tpu7x:2x2x1
jax: 0.10.0
libtpu: 0.0.40
codegen_flags: <defaults>
</compile_context>

<pallas_src>
import jax
import jax.numpy as jnp
from jax import lax
from jax.experimental import pallas as pl
from jax.experimental.pallas import tpu as pltpu


def _round_up(n, m):
    return ((n + m - 1) // m) * m


def _make_residual_block_kernel(H, W, Cin_pad, Cout_pad, use_1x1_conv):
    HW = H * W
    taps = [(ky - 1, kx - 1) for ky in range(3) for kx in range(3)]   # t = ky*3+kx

    def shifted(a, t, m_ref):
        # NOTE: the circular lane-roll over the flattened H*W axis of ONE image is
        # only correct for 3x3 / stride-1 / dilation-1 convs because the border mask
        # (0<=h+dy<H, 0<=w+dx<W) zeroes every position whose flat offset would cross
        # a row boundary.  Do NOT reuse for other kernel sizes/strides/dilations.
        dy, dx = taps[t]
        s = dy * W + dx
        rolled = a if s == 0 else pltpu.roll(a, shift=(-s) % HW, axis=1)
        if t == 4:                         # center tap: mask is all-ones
            return rolled
        return rolled * m_ref[pl.ds(t, 1), :]      # (1, HW) f32 border mask

    def kernel(x_ref, m_ref, w1_ref, b1_ref, w2_ref, b2_ref, o_ref,
               col1_ref, col2_ref):
        x = x_ref[0]                                           # (Cin_pad, HW) f32

        # ---- conv1 (+ folded bn1) + relu : ONE im2col matmul on the MXU --------
        for t in range(9):
            col1_ref[pl.ds(t * Cin_pad, Cin_pad), :] = shifted(x, t, m_ref)
        y1 = jnp.dot(w1_ref[...], col1_ref[...].astype(jnp.bfloat16),
                     preferred_element_type=jnp.float32)       # (Cout_pad, HW)
        y1 = jnp.maximum(y1 + b1_ref[...], 0.0)

        # ---- conv2 (+ folded bn2) [+ fused 1x1 shortcut] : ONE matmul -----------
        for t in range(9):
            col2_ref[pl.ds(t * Cout_pad, Cout_pad), :] = shifted(y1, t, m_ref)
        if use_1x1_conv:
            col2_ref[pl.ds(9 * Cout_pad, Cin_pad), :] = x      # shortcut operand
        y2 = jnp.dot(w2_ref[...], col2_ref[...].astype(jnp.bfloat16),
                     preferred_element_type=jnp.float32) + b2_ref[...]
        if not use_1x1_conv:
            y2 = y2 + x                                        # identity residual

        o_ref[0] = jnp.maximum(y2, 0.0)

    return kernel


def residual_block_pallas(x_nchw, params, *, use_1x1_conv, strides=1, eps=1e-5):
    if strides != 1:
        # TODO(synk): strided residual block (downsampling) not supported.
        raise NotImplementedError("Pallas kernel supports strides=1 only")
    B, Cin, H, W = x_nchw.shape
    Cout = params["conv1_w"].shape[0]
    if not use_1x1_conv and Cin != Cout:
        raise ValueError("use_1x1_conv=True required when in/out channels differ")

    HW = H * W
    Cin_pad = _round_up(Cin, 8)
    Cout_pad = _round_up(Cout, 8)

    def fold_bn(w, b, gamma, beta, mean, var):
        scale = gamma / jnp.sqrt(var + eps)                    # (Cout,)
        return w * scale[:, None, None, None], (b - mean) * scale + beta

    w1_f, b1_f = fold_bn(params["conv1_w"], params["conv1_b"],
                         params["bn1_gamma"], params["bn1_beta"],
                         params["bn1_mean"], params["bn1_var"])
    w2_f, b2_f = fold_bn(params["conv2_w"], params["conv2_b"],
                         params["bn2_gamma"], params["bn2_beta"],
                         params["bn2_mean"], params["bn2_var"])

    def pack_conv3x3(w, cin, cin_pad):
        # (Cout, cin, 3, 3) -> (Cout_pad, 9*cin_pad), column index = t*cin_pad + c.
        w = jnp.pad(w, ((0, Cout_pad - Cout), (0, cin_pad - cin), (0, 0), (0, 0)))
        return jnp.transpose(w, (0, 2, 3, 1)).reshape(Cout_pad, 9 * cin_pad)

    w1_packed = pack_conv3x3(w1_f, Cin, Cin_pad)               # (Cout_pad, 9*Cin_pad)
    w2_packed = pack_conv3x3(w2_f, Cout, Cout_pad)             # (Cout_pad, 9*Cout_pad)
    b1_p = jnp.pad(b1_f, (0, Cout_pad - Cout)).reshape(Cout_pad, 1).astype(jnp.float32)

    b2_full = b2_f
    if use_1x1_conv:
        w3 = params["conv3_w"].reshape(Cout, Cin)
        w3_p = jnp.pad(w3, ((0, Cout_pad - Cout), (0, Cin_pad - Cin)))
        w2_packed = jnp.concatenate([w2_packed, w3_p], axis=1)  # fuse shortcut
        b2_full = b2_f + params["conv3_b"]
    b2_p = jnp.pad(b2_full, (0, Cout_pad - Cout)).reshape(Cout_pad, 1).astype(jnp.float32)

    K1 = 9 * Cin_pad
    K2 = w2_packed.shape[1]
    w1_bf = w1_packed.astype(jnp.bfloat16)
    w2_bf = w2_packed.astype(jnp.bfloat16)

    # Precompute the 9 per-tap border masks on the host (no in-kernel // or %).
    hh = jnp.arange(H)[:, None]
    ww = jnp.arange(W)[None, :]
    masks = [((hh + dy >= 0) & (hh + dy < H) & (ww + dx >= 0) & (ww + dx < W))
             for dy in (-1, 0, 1) for dx in (-1, 0, 1)]
    masks9 = jnp.stack(masks).reshape(9, HW).astype(jnp.float32)

    # (B, Cin, H, W) -> (B, Cin_pad, H*W): reshape + channel zero-pad, no transpose.
    x_flat = jnp.pad(x_nchw.reshape(B, Cin, HW).astype(jnp.float32),
                     ((0, 0), (0, Cin_pad - Cin), (0, 0)))

    kernel = _make_residual_block_kernel(H, W, Cin_pad, Cout_pad, use_1x1_conv)

    flops = 2 * B * HW * Cout_pad * (K1 + K2)
    bytes_accessed = (x_flat.size * 4 + masks9.size * 4 + w1_bf.size * 2
                      + w2_bf.size * 2 + (b1_p.size + b2_p.size) * 4
                      + B * Cout_pad * HW * 4)
    cost = pl.CostEstimate(flops=flops, transcendentals=0,
                           bytes_accessed=bytes_accessed)

    def const_spec(shape):
        return pl.BlockSpec(shape, lambda b: (0,) * len(shape))

    out = pl.pallas_call(
        kernel,
        grid=(B,),
        out_shape=jax.ShapeDtypeStruct((B, Cout_pad, HW), jnp.float32),
        in_specs=[
            pl.BlockSpec((1, Cin_pad, HW), lambda b: (b, 0, 0)),   # x (per image)
            const_spec((9, HW)),                                   # border masks
            const_spec((Cout_pad, K1)),                            # packed W1 (bf16)
            const_spec((Cout_pad, 1)),                             # b1 (f32)
            const_spec((Cout_pad, K2)),                            # packed [W2|W3] (bf16)
            const_spec((Cout_pad, 1)),                             # b2 (+b3) (f32)
        ],
        out_specs=pl.BlockSpec((1, Cout_pad, HW), lambda b: (b, 0, 0)),
        scratch_shapes=[
            pltpu.VMEM((K1, HW), jnp.float32),                     # im2col for conv1
            pltpu.VMEM((K2, HW), jnp.float32),                     # im2col for conv2 (+x)
        ],
        compiler_params=pltpu.CompilerParams(
            dimension_semantics=("parallel",)),
        cost_estimate=cost,
    )(x_flat, masks9, w1_bf, b1_p, w2_bf, b2_p)

    return out[:, :Cout, :].reshape(B, Cout, H, W)                 # NCHW


def residual_block_ref(x, params, *, use_1x1_conv, strides=1, eps=1e-5):
    """Pure-JAX/XLA reference matching the PyTorch forward (eval-mode BN, f32)."""
    def conv(inp, w, b, stride, pad):
        y = lax.conv_general_dilated(
            inp, w, window_strides=(stride, stride),
            padding=[(pad, pad), (pad, pad)],
            dimension_numbers=("NCHW", "OIHW", "NCHW"))
        return y + b[None, :, None, None]

    def bn(inp, g, bta, m, v):
        return (g[None, :, None, None] * (inp - m[None, :, None, None])
                / jnp.sqrt(v[None, :, None, None] + eps) + bta[None, :, None, None])

    y = jax.nn.relu(bn(conv(x, params["conv1_w"], params["conv1_b"], strides, 1),
                       params["bn1_gamma"], params["bn1_beta"],
                       params["bn1_mean"], params["bn1_var"]))
    y = bn(conv(y, params["conv2_w"], params["conv2_b"], 1, 1),
           params["bn2_gamma"], params["bn2_beta"],
           params["bn2_mean"], params["bn2_var"])
    xr = conv(x, params["conv3_w"], params["conv3_b"], strides, 0) if use_1x1_conv else x
    return jax.nn.relu(y + xr)


def _make_params(key, Cin, Cout, use_1x1_conv):
    ks = jax.random.split(key, 16)
    p = dict(
        conv1_w=jax.random.normal(ks[1], (Cout, Cin, 3, 3), jnp.float32) * 0.2,
        conv1_b=jax.random.normal(ks[2], (Cout,), jnp.float32) * 0.1,
        conv2_w=jax.random.normal(ks[3], (Cout, Cout, 3, 3), jnp.float32) * 0.2,
        conv2_b=jax.random.normal(ks[4], (Cout,), jnp.float32) * 0.1,
        bn1_gamma=1.0 + 0.1 * jax.random.normal(ks[7], (Cout,), jnp.float32),
        bn1_beta=0.1 * jax.random.normal(ks[8], (Cout,), jnp.float32),
        bn1_mean=0.1 * jax.random.normal(ks[9], (Cout,), jnp.float32),
        bn1_var=0.5 + jax.nn.sigmoid(jax.random.normal(ks[10], (Cout,), jnp.float32)),
        bn2_gamma=1.0 + 0.1 * jax.random.normal(ks[11], (Cout,), jnp.float32),
        bn2_beta=0.1 * jax.random.normal(ks[12], (Cout,), jnp.float32),
        bn2_mean=0.1 * jax.random.normal(ks[13], (Cout,), jnp.float32),
        bn2_var=0.5 + jax.nn.sigmoid(jax.random.normal(ks[14], (Cout,), jnp.float32)),
    )
    if use_1x1_conv:
        p["conv3_w"] = jax.random.normal(ks[5], (Cout, Cin, 1, 1), jnp.float32) * 0.2
        p["conv3_b"] = jax.random.normal(ks[6], (Cout,), jnp.float32) * 0.1
    return p


if __name__ == "__main__":
    key = jax.random.PRNGKey(0)
    k_x1, k_p1, k_x2, k_p2 = jax.random.split(key, 4)

    # Case 1: Cin != Cout, 1x1-conv shortcut (fused into conv2's matmul).
    B, Cin, Cout, H, W = 2, 4, 8, 16, 16
    x1 = jax.random.normal(k_x1, (B, Cin, H, W), jnp.float32)
    p1 = _make_params(k_p1, Cin, Cout, use_1x1_conv=True)
    out1 = jax.block_until_ready(residual_block_pallas(x1, p1, use_1x1_conv=True))
    ref1 = residual_block_ref(x1, p1, use_1x1_conv=True)
    assert out1.shape == (B, Cout, H, W)
    # bf16 MXU operands (f32 accumulation) -> bf16-aware tolerance vs. the f32 ref.
    assert jnp.allclose(out1, ref1, atol=0.2, rtol=0.05), \
        f"max abs err = {float(jnp.max(jnp.abs(out1 - ref1)))}"
    assert float(jnp.mean(jnp.abs(out1 - ref1))) < 0.02
    assert bool(jnp.all(out1 >= 0.0))          # final ReLU

    # Case 2: Cin == Cout, identity shortcut (no 1x1 conv, plain f32 residual add).
    C2 = 8
    x2 = jax.random.normal(k_x2, (B, C2, H, W), jnp.float32)
    p2 = _make_params(k_p2, C2, C2, use_1x1_conv=False)
    out2 = jax.block_until_ready(residual_block_pallas(x2, p2, use_1x1_conv=False))
    ref2 = residual_block_ref(x2, p2, use_1x1_conv=False)
    assert out2.shape == (B, C2, H, W)
    assert jnp.allclose(out2, ref2, atol=0.2, rtol=0.05), \
        f"max abs err = {float(jnp.max(jnp.abs(out2 - ref2)))}"
    assert float(jnp.mean(jnp.abs(out2 - ref2))) < 0.02
    assert bool(jnp.all(out2 >= 0.0))

    print("KERNEL_OK")
</pallas_src>

<mosaic_0001>
module attributes {stable_mosaic.version = 11 : i64} {
  func.func @kernel(%arg0: i32, %arg1: memref<1x8x256xf32, #tpu.memory_space<vmem>>, %arg2: memref<9x256xf32, #tpu.memory_space<vmem>>, %arg3: memref<8x72xbf16, #tpu.memory_space<vmem>>, %arg4: memref<8x1xf32, #tpu.memory_space<vmem>>, %arg5: memref<8x80xbf16, #tpu.memory_space<vmem>>, %arg6: memref<8x1xf32, #tpu.memory_space<vmem>>, %arg7: memref<1x8x256xf32, #tpu.memory_space<vmem>>, %arg8: memref<72x256xf32, #tpu.memory_space<vmem>>, %arg9: memref<80x256xf32, #tpu.memory_space<vmem>>) attributes {dimension_semantics = [#tpu.dimension_semantics<parallel>], iteration_bounds = array<i64: 2>, scalar_prefetch = 0 : i64, scratch_operands = 2 : i64, tpu.core_type = #tpu.core_type<tc>, window_params = [{transform_indices = @transform_0, window_bounds = array<i64: 1, 8, 256>}, {pipeline_mode = #tpu.pipeline_mode<synchronous>, transform_indices = @transform_1, window_bounds = array<i64: 9, 256>}, {pipeline_mode = #tpu.pipeline_mode<synchronous>, transform_indices = @transform_2, window_bounds = array<i64: 8, 72>}, {pipeline_mode = #tpu.pipeline_mode<synchronous>, transform_indices = @transform_3, window_bounds = array<i64: 8, 1>}, {pipeline_mode = #tpu.pipeline_mode<synchronous>, transform_indices = @transform_4, window_bounds = array<i64: 8, 80>}, {pipeline_mode = #tpu.pipeline_mode<synchronous>, transform_indices = @transform_5, window_bounds = array<i64: 8, 1>}, {transform_indices = @transform_6, window_bounds = array<i64: 1, 8, 256>}]} {
    %c0 = arith.constant 0 : index
    %c0_0 = arith.constant 0 : index
    %c0_1 = arith.constant 0 : index
    %0 = vector.load %arg1[%c0, %c0_0, %c0_1] : memref<1x8x256xf32, #tpu.memory_space<vmem>>, vector<1x8x256xf32>
    %1 = vector.shape_cast %0 : vector<1x8x256xf32> to vector<8x256xf32>
    %c17_i32 = arith.constant 17 : i32
    %2 = tpu.dynamic_rotate %1 by %c17_i32 dim 1 : vector<8x256xf32>, i32 -> vector<8x256xf32>
    %c0_2 = arith.constant 0 : index
    %c0_3 = arith.constant 0 : index
    %3 = vector.load %arg2[%c0_2, %c0_3] : memref<9x256xf32, #tpu.memory_space<vmem>>, vector<1x256xf32>
    %4 = vector.broadcast %3 : vector<1x256xf32> to vector<8x256xf32>
    %5 = arith.mulf %2, %4 : vector<8x256xf32>
    %c0_4 = arith.constant 0 : index
    %c0_5 = arith.constant 0 : index
    %6 = vector.load %arg8[%c0_4, %c0_5] : memref<72x256xf32, #tpu.memory_space<vmem>>, vector<8x256xf32>
    tpu.vector_store %arg8[%c0_4, %c0_5], %5 {strides = array<i32>} : memref<72x256xf32, #tpu.memory_space<vmem>>, vector<8x256xf32>,
    %c16_i32 = arith.constant 16 : i32
    %7 = tpu.dynamic_rotate %1 by %c16_i32 dim 1 : vector<8x256xf32>, i32 -> vector<8x256xf32>
    %c1 = arith.constant 1 : index
    %c0_6 = arith.constant 0 : index
    %8 = vector.load %arg2[%c1, %c0_6] : memref<9x256xf32, #tpu.memory_space<vmem>>, vector<1x256xf32>
    %9 = vector.broadcast %8 : vector<1x256xf32> to vector<8x256xf32>
    %10 = arith.mulf %7, %9 : vector<8x256xf32>
    %c8 = arith.constant 8 : index
    %c0_7 = arith.constant 0 : index
    %11 = vector.load %arg8[%c8, %c0_7] : memref<72x256xf32, #tpu.memory_space<vmem>>, vector<8x256xf32>
    tpu.vector_store %arg8[%c8, %c0_7], %10 {strides = array<i32>} : memref<72x256xf32, #tpu.memory_space<vmem>>, vector<8x256xf32>,
    %c15_i32 = arith.constant 15 : i32
    %12 = tpu.dynamic_rotate %1 by %c15_i32 dim 1 : vector<8x256xf32>, i32 -> vector<8x256xf32>
    %c2 = arith.constant 2 : index
    %c0_8 = arith.constant 0 : index
    %13 = vector.load %arg2[%c2, %c0_8] : memref<9x256xf32, #tpu.memory_space<vmem>>, vector<1x256xf32>
    %14 = vector.broadcast %13 : vector<1x256xf32> to vector<8x256xf32>
    %15 = arith.mulf %12, %14 : vector<8x256xf32>
    %c16 = arith.constant 16 : index
    %c0_9 = arith.constant 0 : index
    %16 = vector.load %arg8[%c16, %c0_9] : memref<72x256xf32, #tpu.memory_space<vmem>>, vector<8x256xf32>
    tpu.vector_store %arg8[%c16, %c0_9], %15 {strides = array<i32>} : memref<72x256xf32, #tpu.memory_space<vmem>>, vector<8x256xf32>,
    %c1_i32 = arith.constant 1 : i32
    %17 = tpu.dynamic_rotate %1 by %c1_i32 dim 1 : vector<8x256xf32>, i32 -> vector<8x256xf32>
    %c3 = arith.constant 3 : index
    %c0_10 = arith.constant 0 : index
    %18 = vector.load %arg2[%c3, %c0_10] : memref<9x256xf32, #tpu.memory_space<vmem>>, vector<1x256xf32>
    %19 = vector.broadcast %18 : vector<1x256xf32> to vector<8x256xf32>
    %20 = arith.mulf %17, %19 : vector<8x256xf32>
    %c24 = arith.constant 24 : index
    %c0_11 = arith.constant 0 : index
    %21 = vector.load %arg8[%c24, %c0_11] : memref<72x256xf32, #tpu.memory_space<vmem>>, vector<8x256xf32>
    tpu.vector_store %arg8[%c24, %c0_11], %20 {strides = array<i32>} : memref<72x256xf32, #tpu.memory_space<vmem>>, vector<8x256xf32>,
    %c32 = arith.constant 32 : index
    %c0_12 = arith.constant 0 : index
    %22 = vector.load %arg8[%c32, %c0_12] : memref<72x256xf32, #tpu.memory_space<vmem>>, vector<8x256xf32>
    tpu.vector_store %arg8[%c32, %c0_12], %1 {strides = array<i32>} : memref<72x256xf32, #tpu.memory_space<vmem>>, vector<8x256xf32>,
    %c255_i32 = arith.constant 255 : i32
    %23 = tpu.dynamic_rotate %1 by %c255_i32 dim 1 : vector<8x256xf32>, i32 -> vector<8x256xf32>
    %c5 = arith.constant 5 : index
    %c0_13 = arith.constant 0 : index
    %24 = vector.load %arg2[%c5, %c0_13] : memref<9x256xf32, #tpu.memory_space<vmem>>, vector<1x256xf32>
    %25 = vector.broadcast %24 : vector<1x256xf32> to vector<8x256xf32>
    %26 = arith.mulf %23, %25 : vector<8x256xf32>
    %c40 = arith.constant 40 : index
    %c0_14 = arith.constant 0 : index
    %27 = vector.load %arg8[%c40, %c0_14] : memref<72x256xf32, #tpu.memory_space<vmem>>, vector<8x256xf32>
    tpu.vector_store %arg8[%c40, %c0_14], %26 {strides = array<i32>} : memref<72x256xf32, #tpu.memory_space<vmem>>, vector<8x256xf32>,
    %c241_i32 = arith.constant 241 : i32
    %28 = tpu.dynamic_rotate %1 by %c241_i32 dim 1 : vector<8x256xf32>, i32 -> vector<8x256xf32>
    %c6 = arith.constant 6 : index
    %c0_15 = arith.constant 0 : index
    %29 = vector.load %arg2[%c6, %c0_15] : memref<9x256xf32, #tpu.memory_space<vmem>>, vector<1x256xf32>
    %30 = vector.broadcast %29 : vector<1x256xf32> to vector<8x256xf32>
    %31 = arith.mulf %28, %30 : vector<8x256xf32>
    %c48 = arith.constant 48 : index
    %c0_16 = arith.constant 0 : index
    %32 = vector.load %arg8[%c48, %c0_16] : memref<72x256xf32, #tpu.memory_space<vmem>>, vector<8x256xf32>
    tpu.vector_store %arg8[%c48, %c0_16], %31 {strides = array<i32>} : memref<72x256xf32, #tpu.memory_space<vmem>>, vector<8x256xf32>,
    %c240_i32 = arith.constant 240 : i32
    %33 = tpu.dynamic_rotate %1 by %c240_i32 dim 1 : vector<8x256xf32>, i32 -> vector<8x256xf32>
    %c7 = arith.constant 7 : index
    %c0_17 = arith.constant 0 : index
    %34 = vector.load %arg2[%c7, %c0_17] : memref<9x256xf32, #tpu.memory_space<vmem>>, vector<1x256xf32>
    %35 = vector.broadcast %34 : vector<1x256xf32> to vector<8x256xf32>
    %36 = arith.mulf %33, %35 : vector<8x256xf32>
    %c56 = arith.constant 56 : index
    %c0_18 = arith.constant 0 : index
    %37 = vector.load %arg8[%c56, %c0_18] : memref<72x256xf32, #tpu.memory_space<vmem>>, vector<8x256xf32>
    tpu.vector_store %arg8[%c56, %c0_18], %36 {strides = array<i32>} : memref<72x256xf32, #tpu.memory_space<vmem>>, vector<8x256xf32>,
    %c239_i32 = arith.constant 239 : i32
    %38 = tpu.dynamic_rotate %1 by %c239_i32 dim 1 : vector<8x256xf32>, i32 -> vector<8x256xf32>
    %c8_19 = arith.constant 8 : index
    %c0_20 = arith.constant 0 : index
    %39 = vector.load %arg2[%c8_19, %c0_20] : memref<9x256xf32, #tpu.memory_space<vmem>>, vector<1x256xf32>
    %40 = vector.broadcast %39 : vector<1x256xf32> to vector<8x256xf32>
    %41 = arith.mulf %38, %40 : vector<8x256xf32>
    %c64 = arith.constant 64 : index
    %c0_21 = arith.constant 0 : index
    %42 = vector.load %arg8[%c64, %c0_21] : memref<72x256xf32, #tpu.memory_space<vmem>>, vector<8x256xf32>
    tpu.vector_store %arg8[%c64, %c0_21], %41 {strides = array<i32>} : memref<72x256xf32, #tpu.memory_space<vmem>>, vector<8x256xf32>,
    %c0_22 = arith.constant 0 : index
    %c0_23 = arith.constant 0 : index
    %43 = vector.load %arg3[%c0_22, %c0_23] : memref<8x72xbf16, #tpu.memory_space<vmem>>, vector<8x72xbf16>
    %c0_24 = arith.constant 0 : index
    %c0_25 = arith.constant 0 : index
    %44 = vector.load %arg8[%c0_24, %c0_25] : memref<72x256xf32, #tpu.memory_space<vmem>>, vector<72x256xf32>
    %45 = arith.truncf %44 : vector<72x256xf32> to vector<72x256xbf16>
    %cst = arith.constant dense<0.000000e+00> : vector<8x256xf32>
    %46 = tpu.matmul %43, %45, %cst {dimension_numbers = #tpu.dot_dimension_numbers<[1], [0], [0], [1], [0, 0, 1, 1], [], []>} : vector<8x72xbf16>, vector<72x256xbf16>, vector<8x256xf32> -> vector<8x256xf32>
    %c0_26 = arith.constant 0 : index
    %c0_27 = arith.constant 0 : index
    %47 = vector.load %arg4[%c0_26, %c0_27] : memref<8x1xf32, #tpu.memory_space<vmem>>, vector<8x1xf32>
    %48 = vector.broadcast %47 : vector<8x1xf32> to vector<8x256xf32>
    %49 = arith.addf %46, %48 : vector<8x256xf32>
    %cst_28 = arith.constant 0.000000e+00 : f32
    %50 = vector.broadcast %cst_28 : f32 to vector<8x256xf32>
    %51 = arith.maximumf %49, %50 : vector<8x256xf32>
    %c17_i32_29 = arith.constant 17 : i32
    %52 = tpu.dynamic_rotate %51 by %c17_i32_29 dim 1 : vector<8x256xf32>, i32 -> vector<8x256xf32>
    %c0_30 = arith.constant 0 : index
    %c0_31 = arith.constant 0 : index
    %53 = vector.load %arg2[%c0_30, %c0_31] : memref<9x256xf32, #tpu.memory_space<vmem>>, vector<1x256xf32>
    %54 = vector.broadcast %53 : vector<1x256xf32> to vector<8x256xf32>
    %55 = arith.mulf %52, %54 : vector<8x256xf32>
    %c0_32 = arith.constant 0 : index
    %c0_33 = arith.constant 0 : index
    %56 = vector.load %arg9[%c0_32, %c0_33] : memref<80x256xf32, #tpu.memory_space<vmem>>, vector<8x256xf32>
    tpu.vector_store %arg9[%c0_32, %c0_33], %55 {strides = array<i32>} : memref<80x256xf32, #tpu.memory_space<vmem>>, vector<8x256xf32>,
    %c16_i32_34 = arith.constant 16 : i32
    %57 = tpu.dynamic_rotate %51 by %c16_i32_34 dim 1 : vector<8x256xf32>, i32 -> vector<8x256xf32>
    %c1_35 = arith.constant 1 : index
    %c0_36 = arith.constant 0 : index
    %58 = vector.load %arg2[%c1_35, %c0_36] : memref<9x256xf32, #tpu.memory_space<vmem>>, vector<1x256xf32>
    %59 = vector.broadcast %58 : vector<1x256xf32> to vector<8x256xf32>
    %60 = arith.mulf %57, %59 : vector<8x256xf32>
    %c8_37 = arith.constant 8 : index
    %c0_38 = arith.constant 0 : index
    %61 = vector.load %arg9[%c8_37, %c0_38] : memref<80x256xf32, #tpu.memory_space<vmem>>, vector<8x256xf32>
    tpu.vector_store %arg9[%c8_37, %c0_38], %60 {strides = array<i32>} : memref<80x256xf32, #tpu.memory_space<vmem>>, vector<8x256xf32>,
    %c15_i32_39 = arith.constant 15 : i32
    %62 = tpu.dynamic_rotate %51 by %c15_i32_39 dim 1 : vector<8x256xf32>, i32 -> vector<8x256xf32>
    %c2_40 = arith.constant 2 : index
    %c0_41 = arith.constant 0 : index
    %63 = vector.load %arg2[%c2_40, %c0_41] : memref<9x256xf32, #tpu.memory_space<vmem>>, vector<1x256xf32>
    %64 = vector.broadcast %63 : vector<1x256xf32> to vector<8x256xf32>
    %65 = arith.mulf %62, %64 : vector<8x256xf32>
    %c16_42 = arith.constant 16 : index
    %c0_43 = arith.constant 0 : index
    %66 = vector.load %arg9[%c16_42, %c0_43] : memref<80x256xf32, #tpu.memory_space<vmem>>, vector<8x256xf32>
    tpu.vector_store %arg9[%c16_42, %c0_43], %65 {strides = array<i32>} : memref<80x256xf32, #tpu.memory_space<vmem>>, vector<8x256xf32>,
    %c1_i32_44 = arith.constant 1 : i32
    %67 = tpu.dynamic_rotate %51 by %c1_i32_44 dim 1 : vector<8x256xf32>, i32 -> vector<8x256xf32>
    %c3_45 = arith.constant 3 : index
    %c0_46 = arith.constant 0 : index
    %68 = vector.load %arg2[%c3_45, %c0_46] : memref<9x256xf32, #tpu.memory_space<vmem>>, vector<1x256xf32>
    %69 = vector.broadcast %68 : vector<1x256xf32> to vector<8x256xf32>
    %70 = arith.mulf %67, %69 : vector<8x256xf32>
    %c24_47 = arith.constant 24 : index
    %c0_48 = arith.constant 0 : index
    %71 = vector.load %arg9[%c24_47, %c0_48] : memref<80x256xf32, #tpu.memory_space<vmem>>, vector<8x256xf32>
    tpu.vector_store %arg9[%c24_47, %c0_48], %70 {strides = array<i32>} : memref<80x256xf32, #tpu.memory_space<vmem>>, vector<8x256xf32>,
    %c32_49 = arith.constant 32 : index
    %c0_50 = arith.constant 0 : index
    %72 = vector.load %arg9[%c32_49, %c0_50] : memref<80x256xf32, #tpu.memory_space<vmem>>, vector<8x256xf32>
    tpu.vector_store %arg9[%c32_49, %c0_50], %51 {strides = array<i32>} : memref<80x256xf32, #tpu.memory_space<vmem>>, vector<8x256xf32>,
    %c255_i32_51 = arith.constant 255 : i32
    %73 = tpu.dynamic_rotate %51 by %c255_i32_51 dim 1 : vector<8x256xf32>, i32 -> vector<8x256xf32>
    %c5_52 = arith.constant 5 : index
    %c0_53 = arith.constant 0 : index
    %74 = vector.load %arg2[%c5_52, %c0_53] : memref<9x256xf32, #tpu.memory_space<vmem>>, vector<1x256xf32>
    %75 = vector.broadcast %74 : vector<1x256xf32> to vector<8x256xf32>
    %76 = arith.mulf %73, %75 : vector<8x256xf32>
    %c40_54 = arith.constant 40 : index
    %c0_55 = arith.constant 0 : index
    %77 = vector.load %arg9[%c40_54, %c0_55] : memref<80x256xf32, #tpu.memory_space<vmem>>, vector<8x256xf32>
    tpu.vector_store %arg9[%c40_54, %c0_55], %76 {strides = array<i32>} : memref<80x256xf32, #tpu.memory_space<vmem>>, vector<8x256xf32>,
    %c241_i32_56 = arith.constant 241 : i32
    %78 = tpu.dynamic_rotate %51 by %c241_i32_56 dim 1 : vector<8x256xf32>, i32 -> vector<8x256xf32>
    %c6_57 = arith.constant 6 : index
    %c0_58 = arith.constant 0 : index
    %79 = vector.load %arg2[%c6_57, %c0_58] : memref<9x256xf32, #tpu.memory_space<vmem>>, vector<1x256xf32>
    %80 = vector.broadcast %79 : vector<1x256xf32> to vector<8x256xf32>
    %81 = arith.mulf %78, %80 : vector<8x256xf32>
    %c48_59 = arith.constant 48 : index
    %c0_60 = arith.constant 0 : index
    %82 = vector.load %arg9[%c48_59, %c0_60] : memref<80x256xf32, #tpu.memory_space<vmem>>, vector<8x256xf32>
    tpu.vector_store %arg9[%c48_59, %c0_60], %81 {strides = array<i32>} : memref<80x256xf32, #tpu.memory_space<vmem>>, vector<8x256xf32>,
    %c240_i32_61 = arith.constant 240 : i32
    %83 = tpu.dynamic_rotate %51 by %c240_i32_61 dim 1 : vector<8x256xf32>, i32 -> vector<8x256xf32>
    %c7_62 = arith.constant 7 : index
    %c0_63 = arith.constant 0 : index
    %84 = vector.load %arg2[%c7_62, %c0_63] : memref<9x256xf32, #tpu.memory_space<vmem>>, vector<1x256xf32>
    %85 = vector.broadcast %84 : vector<1x256xf32> to vector<8x256xf32>
    %86 = arith.mulf %83, %85 : vector<8x256xf32>
    %c56_64 = arith.constant 56 : index
    %c0_65 = arith.constant 0 : index
    %87 = vector.load %arg9[%c56_64, %c0_65] : memref<80x256xf32, #tpu.memory_space<vmem>>, vector<8x256xf32>
    tpu.vector_store %arg9[%c56_64, %c0_65], %86 {strides = array<i32>} : memref<80x256xf32, #tpu.memory_space<vmem>>, vector<8x256xf32>,
    %c239_i32_66 = arith.constant 239 : i32
    %88 = tpu.dynamic_rotate %51 by %c239_i32_66 dim 1 : vector<8x256xf32>, i32 -> vector<8x256xf32>
    %c8_67 = arith.constant 8 : index
    %c0_68 = arith.constant 0 : index
    %89 = vector.load %arg2[%c8_67, %c0_68] : memref<9x256xf32, #tpu.memory_space<vmem>>, vector<1x256xf32>
    %90 = vector.broadcast %89 : vector<1x256xf32> to vector<8x256xf32>
    %91 = arith.mulf %88, %90 : vector<8x256xf32>
    %c64_69 = arith.constant 64 : index
    %c0_70 = arith.constant 0 : index
    %92 = vector.load %arg9[%c64_69, %c0_70] : memref<80x256xf32, #tpu.memory_space<vmem>>, vector<8x256xf32>
    tpu.vector_store %arg9[%c64_69, %c0_70], %91 {strides = array<i32>} : memref<80x256xf32, #tpu.memory_space<vmem>>, vector<8x256xf32>,
    %c72 = arith.constant 72 : index
    %c0_71 = arith.constant 0 : index
    %93 = vector.load %arg9[%c72, %c0_71] : memref<80x256xf32, #tpu.memory_space<vmem>>, vector<8x256xf32>
    tpu.vector_store %arg9[%c72, %c0_71], %1 {strides = array<i32>} : memref<80x256xf32, #tpu.memory_space<vmem>>, vector<8x256xf32>,
    %c0_72 = arith.constant 0 : index
    %c0_73 = arith.constant 0 : index
    %94 = vector.load %arg5[%c0_72, %c0_73] : memref<8x80xbf16, #tpu.memory_space<vmem>>, vector<8x80xbf16>
    %c0_74 = arith.constant 0 : index
    %c0_75 = arith.constant 0 : index
    %95 = vector.load %arg9[%c0_74, %c0_75] : memref<80x256xf32, #tpu.memory_space<vmem>>, vector<80x256xf32>
    %96 = arith.truncf %95 : vector<80x256xf32> to vector<80x256xbf16>
    %cst_76 = arith.constant dense<0.000000e+00> : vector<8x256xf32>
    %97 = tpu.matmul %94, %96, %cst_76 {dimension_numbers = #tpu.dot_dimension_numbers<[1], [0], [0], [1], [0, 0, 1, 1], [], []>} : vector<8x80xbf16>, vector<80x256xbf16>, vector<8x256xf32> -> vector<8x256xf32>
    %c0_77 = arith.constant 0 : index
    %c0_78 = arith.constant 0 : index
    %98 = vector.load %arg6[%c0_77, %c0_78] : memref<8x1xf32, #tpu.memory_space<vmem>>, vector<8x1xf32>
    %99 = vector.broadcast %98 : vector<8x1xf32> to vector<8x256xf32>
    %100 = arith.addf %97, %99 : vector<8x256xf32>
    %cst_79 = arith.constant 0.000000e+00 : f32
    %101 = vector.broadcast %cst_79 : f32 to vector<8x256xf32>
    %102 = arith.maximumf %100, %101 : vector<8x256xf32>
    %c0_80 = arith.constant 0 : index
    %c0_81 = arith.constant 0 : index
    %c0_82 = arith.constant 0 : index
    %103 = vector.load %arg7[%c0_80, %c0_81, %c0_82] : memref<1x8x256xf32, #tpu.memory_space<vmem>>, vector<1x8x256xf32>
    %104 = vector.shape_cast %103 : vector<1x8x256xf32> to vector<8x256xf32>
    %105 = vector.shape_cast %102 : vector<8x256xf32> to vector<1x8x256xf32>
    tpu.vector_store %arg7[%c0_80, %c0_81, %c0_82], %105 {strides = array<i32>} : memref<1x8x256xf32, #tpu.memory_space<vmem>>, vector<1x8x256xf32>,
    return
  }
  func.func @transform_0(%arg0: i32) -> (i32, i32, i32) {
    %c0_i32 = arith.constant 0 : i32
    %c0_i32_0 = arith.constant 0 : i32
    %c0_i32_1 = arith.constant 0 : i32
    return %arg0, %c0_i32, %c0_i32_0 : i32, i32, i32
  }
  func.func @transform_1(%arg0: i32) -> (i32, i32) {
    %c0_i32 = arith.constant 0 : i32
    %c0_i32_0 = arith.constant 0 : i32
    %c0_i32_1 = arith.constant 0 : i32
    return %c0_i32, %c0_i32_0 : i32, i32
  }
  func.func @transform_2(%arg0: i32) -> (i32, i32) {
    %c0_i32 = arith.constant 0 : i32
    %c0_i32_0 = arith.constant 0 : i32
    %c0_i32_1 = arith.constant 0 : i32
    return %c0_i32, %c0_i32_0 : i32, i32
  }
  func.func @transform_3(%arg0: i32) -> (i32, i32) {
    %c0_i32 = arith.constant 0 : i32
    %c0_i32_0 = arith.constant 0 : i32
    %c0_i32_1 = arith.constant 0 : i32
    return %c0_i32, %c0_i32_0 : i32, i32
  }
  func.func @transform_4(%arg0: i32) -> (i32, i32) {
    %c0_i32 = arith.constant 0 : i32
    %c0_i32_0 = arith.constant 0 : i32
    %c0_i32_1 = arith.constant 0 : i32
    return %c0_i32, %c0_i32_0 : i32, i32
  }
  func.func @transform_5(%arg0: i32) -> (i32, i32) {
    %c0_i32 = arith.constant 0 : i32
    %c0_i32_0 = arith.constant 0 : i32
    %c0_i32_1 = arith.constant 0 : i32
    return %c0_i32, %c0_i32_0 : i32, i32
  }
  func.func @transform_6(%arg0: i32) -> (i32, i32, i32) {
    %c0_i32 = arith.constant 0 : i32
    %c0_i32_0 = arith.constant 0 : i32
    %c0_i32_1 = arith.constant 0 : i32
    return %arg0, %c0_i32, %c0_i32_0 : i32, i32, i32
  }
}

</mosaic_0001>

<llo_original>
// kernel: tpu_custom_call.1
$region0: #{tpu_custom_call.1}
  #allocation0 [shape = 'u32[]', space=smem, size = 0x4, offset = 0x4, fixed_abs, tag = 'smem constant byte address 0x4 - core index']
  #allocation1 [shape = 'u32[144,128]{1,0:T(1,128)}', space=vmem, size = 0x12000, scoped, tag = 'internal scratch']
  #allocation2 [shape = 'f32[72,256]{1,0:T(8,128)}', space=vmem, size = 0x12000, scoped, tag = 'scratch operand']
  #allocation3 [shape = 'f32[80,256]{1,0:T(8,128)}', space=vmem, size = 0x14000, scoped, tag = 'scratch operand']
  %s0 = inlined_call_operand.hbm [shape: f32[2,8,256], index: 0, kind: input, shape index: {}]
  %s1 = inlined_call_operand.hbm [shape: f32[9,256], index: 1, kind: input, shape index: {}]
  %s2 = inlined_call_operand.vmem [shape: bf16[8,72], index: 2, kind: input, shape index: {}]
  %s3 = inlined_call_operand.vmem [shape: f32[8,1], index: 3, kind: input, shape index: {}]
  %s4 = inlined_call_operand.vmem [shape: bf16[8,80], index: 4, kind: input, shape index: {}]
  %s5 = inlined_call_operand.vmem [shape: f32[8,1], index: 5, kind: input, shape index: {}]
  %s6 = inlined_call_operand.hbm [shape: f32[2,8,256], index: 6, kind: output, shape index: {}]
  %s7 = sld [smem:[#allocation0]]
  $region65: #{tpu_custom_call.1} parent=0
    _
  %s9 = ssub.s32 1, %s7
  %s10 = scalar_select 0, %s9, %s7
  $region1: #{tpu_custom_call.1} parent=0
    #allocation4 [shape = 'u8[16384]{0}', space=vmem, size = 0x4000, scoped, tag = 'input window, operand 0']
    #allocation5 [shape = 's32[2]{0}', space=sflag, size = 0x8, scoped, tag = 'scoped memory for tpu_custom_call.1']
    #allocation6 [shape = 's32[2]{0}', space=sflag, size = 0x8, scoped, tag = 'scoped memory for tpu_custom_call.1']
    #allocation7 [shape = 'u8[16384]{0}', space=vmem, size = 0x4000, scoped, tag = 'input window, operand 1, single buffered']
    #allocation8 [shape = 's32[1]{0}', space=sflag, size = 0x4, scoped, tag = 'scoped memory for tpu_custom_call.1']
    #allocation9 [shape = 'u8[16384]{0}', space=vmem, size = 0x4000, scoped, tag = 'output window, operand 0']
    %11 = vsyncpa [#allocation5], 0
    %s12 = scalar_lea.sflag [#allocation5], 1
    %13 = vsyncpa %s12, 0
    %14 = vsyncpa [#allocation8], 0
    %15 = vsyncpa [#allocation6], 0
    %s16 = scalar_lea.sflag [#allocation6], 1
    %17 = vsyncpa %s16, 0
    loop: start=0, step=1, limit=4
    $region2: #{tpu_custom_call.1} parent=1 // loop_pre_header
      _
    $region3: #{tpu_custom_call.1} parent=1 // loop_header
      %s19 = sphi 0, %s23
      %p20 = scmp.ge.s32.totalorder %s19, 4
      %s29 = sphi 0, %s31
      %s32 = sphi 0, %s29
      %s33 = sphi 0, %s32
      %s49 = sphi 0, %s33
      %s53 = sphi 0, %s53
      %s55 = sphi 0, %s53
      %s56 = sphi 0, %s55
      %s70 = sphi 0, %s56
      %s74 = sphi 0, %s74
      %s76 = sphi 0, %s74
      %s77 = sphi 0, %s76
      %s91 = sphi 0, %s77
      %s95 = sphi 0, %s95
      %s97 = sphi 0, %s95
      %s98 = sphi 0, %s97
      %s112 = sphi 0, %s98
      %s116 = sphi 0, %s116
      %s118 = sphi 0, %s116
      %s119 = sphi 0, %s118
      %s133 = sphi 0, %s119
      %s137 = sphi 0, %s137
      %s139 = sphi 0, %s137
      %s140 = sphi 0, %s139
      %s154 = sphi 0, %s140
      %s160 = sphi 0, %s162
      %s163 = sphi 0, %s160
      %s164 = sphi 0, %s163
      %s180 = sphi 0, %s164
    $region4: #{tpu_custom_call.1} parent=1 // loop_header_branch
      %22 = sbr.rel (%p20) target = $region8
    $region5: #{tpu_custom_call.1} parent=1 // loop_body
      %s24 = ssub.s32 %s19, 1
      %s25 = ssub.s32 %s19, 2
      %s26 = sadd.s32 %s19, 1
      %s27 = ssub.s32 %s19, %s26
      %p28 = scmp.eq.s32.totalorder %s27, 0
      %s30 = sadd.s32 %s29, 1
      %s31 = scalar_select %p28, %s29, %s30
      %p34 = pneg %p28
      %p35 = scmp.eq.s32.totalorder %s19, 1
      %p36 = por %p34, %p35
      %p37 = scmp.ne.s32.totalorder %s29, %s32
      %p38 = scmp.eq.s32.totalorder %s19, 0
      %p39 = por %p37, %p38
      %p40 = scmp.ne.s32.totalorder %s29, %s32
      %p41 = scmp.eq.s32.totalorder %s24, 1
      %p42 = por %p40, %p41
      %p43 = scmp.ne.s32.totalorder %s32, %s33
      %p44 = scmp.eq.s32.totalorder %s24, 0
      %p45 = por %p43, %p44
      %p46 = scmp.ne.s32.totalorder %s32, %s33
      %p47 = scmp.eq.s32.totalorder %s25, 1
      %p48 = por %p46, %p47
      %p50 = scmp.ne.s32.totalorder %s33, %s49
      %p51 = scmp.eq.s32.totalorder %s25, 0
      %p52 = por %p50, %p51
      %s54 = sadd.s32 %s53, 1
      %p57 = scmp.eq.s32.totalorder %s19, 1
      %p58 = scmp.ne.s32.totalorder %s53, %s55
      %p59 = scmp.eq.s32.totalorder %s19, 0
      %p60 = por %p58, %p59
      %p61 = scmp.ne.s32.totalorder %s53, %s55
      %p62 = scmp.eq.s32.totalorder %s24, 1
      %p63 = por %p61, %p62
      %p64 = scmp.ne.s32.totalorder %s55, %s56
      %p65 = scmp.eq.s32.totalorder %s24, 0
      %p66 = por %p64, %p65
      %p67 = scmp.ne.s32.totalorder %s55, %s56
      %p68 = scmp.eq.s32.totalorder %s25, 1
      %p69 = por %p67, %p68
      %p71 = scmp.ne.s32.totalorder %s56, %s70
      %p72 = scmp.eq.s32.totalorder %s25, 0
      %p73 = por %p71, %p72
      %s75 = sadd.s32 %s74, 1
      %p78 = scmp.eq.s32.totalorder %s19, 1
      %p79 = scmp.ne.s32.totalorder %s74, %s76
      %p80 = scmp.eq.s32.totalorder %s19, 0
      %p81 = por %p79, %p80
      %p82 = scmp.ne.s32.totalorder %s74, %s76
      %p83 = scmp.eq.s32.totalorder %s24, 1
      %p84 = por %p82, %p83
      %p85 = scmp.ne.s32.totalorder %s76, %s77
      %p86 = scmp.eq.s32.totalorder %s24, 0
      %p87 = por %p85, %p86
      %p88 = scmp.ne.s32.totalorder %s76, %s77
      %p89 = scmp.eq.s32.totalorder %s25, 1
      %p90 = por %p88, %p89
      %p92 = scmp.ne.s32.totalorder %s77, %s91
      %p93 = scmp.eq.s32.totalorder %s25, 0
      %p94 = por %p92, %p93
      %s96 = sadd.s32 %s95, 1
      %p99 = scmp.eq.s32.totalorder %s19, 1
      %p100 = scmp.ne.s32.totalorder %s95, %s97
      %p101 = scmp.eq.s32.totalorder %s19, 0
      %p102 = por %p100, %p101
      %p103 = scmp.ne.s32.totalorder %s95, %s97
      %p104 = scmp.eq.s32.totalorder %s24, 1
      %p105 = por %p103, %p104
      %p106 = scmp.ne.s32.totalorder %s97, %s98
      %p107 = scmp.eq.s32.totalorder %s24, 0
      %p108 = por %p106, %p107
      %p109 = scmp.ne.s32.totalorder %s97, %s98
      %p110 = scmp.eq.s32.totalorder %s25, 1
      %p111 = por %p109, %p110
      %p113 = scmp.ne.s32.totalorder %s98, %s112
      %p114 = scmp.eq.s32.totalorder %s25, 0
      %p115 = por %p113, %p114
      %s117 = sadd.s32 %s116, 1
      %p120 = scmp.eq.s32.totalorder %s19, 1
      %p121 = scmp.ne.s32.totalorder %s116, %s118
      %p122 = scmp.eq.s32.totalorder %s19, 0
      %p123 = por %p121, %p122
      %p124 = scmp.ne.s32.totalorder %s116, %s118
      %p125 = scmp.eq.s32.totalorder %s24, 1
      %p126 = por %p124, %p125
      %p127 = scmp.ne.s32.totalorder %s118, %s119
      %p128 = scmp.eq.s32.totalorder %s24, 0
      %p129 = por %p127, %p128
      %p130 = scmp.ne.s32.totalorder %s118, %s119
      %p131 = scmp.eq.s32.totalorder %s25, 1
      %p132 = por %p130, %p131
      %p134 = scmp.ne.s32.totalorder %s119, %s133
      %p135 = scmp.eq.s32.totalorder %s25, 0
      %p136 = por %p134, %p135
      %s138 = sadd.s32 %s137, 1
      %p141 = scmp.eq.s32.totalorder %s19, 1
      %p142 = scmp.ne.s32.totalorder %s137, %s139
      %p143 = scmp.eq.s32.totalorder %s19, 0
      %p144 = por %p142, %p143
      %p145 = scmp.ne.s32.totalorder %s137, %s139
      %p146 = scmp.eq.s32.totalorder %s24, 1
      %p147 = por %p145, %p146
      %p148 = scmp.ne.s32.totalorder %s139, %s140
      %p149 = scmp.eq.s32.totalorder %s24, 0
      %p150 = por %p148, %p149
      %p151 = scmp.ne.s32.totalorder %s139, %s140
      %p152 = scmp.eq.s32.totalorder %s25, 1
      %p153 = por %p151, %p152
      %p155 = scmp.ne.s32.totalorder %s140, %s154
      %p156 = scmp.eq.s32.totalorder %s25, 0
      %p157 = por %p155, %p156
      %s158 = ssub.s32 %s19, %s26
      %p159 = scmp.eq.s32.totalorder %s158, 0
      %s161 = sadd.s32 %s160, 1
      %s162 = scalar_select %p159, %s160, %s161
      %p165 = pneg %p159
      %p166 = scmp.eq.s32.totalorder %s19, 1
      %p167 = por %p165, %p166
      %p168 = scmp.ne.s32.totalorder %s160, %s163
      %p169 = scmp.eq.s32.totalorder %s19, 0
      %p170 = por %p168, %p169
      %p171 = scmp.ne.s32.totalorder %s160, %s163
      %p172 = scmp.eq.s32.totalorder %s24, 1
      %p173 = por %p171, %p172
      %p174 = scmp.ne.s32.totalorder %s163, %s164
      %p175 = scmp.eq.s32.totalorder %s24, 0
      %p176 = por %p174, %p175
      %p177 = scmp.ne.s32.totalorder %s163, %s164
      %p178 = scmp.eq.s32.totalorder %s25, 1
      %p179 = por %p177, %p178
      %p181 = scmp.ne.s32.totalorder %s164, %s180
      %p182 = scmp.eq.s32.totalorder %s25, 0
      %p183 = por %p181, %p182
      %p184 = scmp.le.s32.totalorder 1, %s19
      %p185 = scmp.lt.s32.totalorder %s19, 3
      %p186 = pnand %p184, %p185
      %p187 = pneg %p186
      // Predicated region
      $region9: #{tpu_custom_call.1} parent=5 // pred_check
        _
      $region10: #{tpu_custom_call.1} parent=5 // pred_check_branch
        %189 = sbr.rel (%p186) target = $region12
      $region11: #{tpu_custom_call.1} parent=5 // pred_region
        %s190 = ssub.s32 %s19, 1
        // Predicated region
        $region13: #{tpu_custom_call.1} parent=11 // pred_check
          %p191 = pneg %p66
        $region14: #{tpu_custom_call.1} parent=11 // pred_check_branch
          %193 = sbr.rel (%p191) target = $region16
        $region15: #{tpu_custom_call.1} parent=11 // pred_region
          %s195 = ssub.s32 512, 512
          %196 = vsyncadd [#allocation8], %s195
          %s197 = sshll.u32 [#allocation7], 4
          %s198 = int_to_ptr.vmem [resolvable:$true] %s197
          %203 = dma.hbm_to_vmem [thread:$0]  %s1, 512, %s198, [#allocation8], 256, 256, 16
        $region16: #{tpu_custom_call.1} parent=11 // pred_fallthru
          _
        // Predicated region
        $region17: #{tpu_custom_call.1} parent=11 // pred_check
          %p204 = pneg %p87
        $region18: #{tpu_custom_call.1} parent=11 // pred_check_branch
          %206 = sbr.rel (%p204) target = $region20
        $region19: #{tpu_custom_call.1} parent=11 // pred_region
          _
        $region20: #{tpu_custom_call.1} parent=11 // pred_fallthru
          _
        // Predicated region
        $region21: #{tpu_custom_call.1} parent=11 // pred_check
          %p207 = pneg %p108
        $region22: #{tpu_custom_call.1} parent=11 // pred_check_branch
          %209 = sbr.rel (%p207) target = $region24
        $region23: #{tpu_custom_call.1} parent=11 // pred_region
          _
        $region24: #{tpu_custom_call.1} parent=11 // pred_fallthru
          _
        // Predicated region
        $region25: #{tpu_custom_call.1} parent=11 // pred_check
          %p210 = pneg %p129
        $region26: #{tpu_custom_call.1} parent=11 // pred_check_branch
          %212 = sbr.rel (%p210) target = $region28
        $region27: #{tpu_custom_call.1} parent=11 // pred_region
          _
        $region28: #{tpu_custom_call.1} parent=11 // pred_fallthru
          _
        // Predicated region
        $region29: #{tpu_custom_call.1} parent=11 // pred_check
          %p213 = pneg %p150
        $region30: #{tpu_custom_call.1} parent=11 // pred_check_branch
          %215 = sbr.rel (%p213) target = $region32
        $region31: #{tpu_custom_call.1} parent=11 // pred_region
          _
        $region32: #{tpu_custom_call.1} parent=11 // pred_fallthru
          _
      $region12: #{tpu_custom_call.1} parent=5 // pred_fallthru
        _
      %p216 = scmp.lt.s32.totalorder %s19, 2
      // Predicated region
      $region33: #{tpu_custom_call.1} parent=5 // pred_check
        %p217 = pneg %p216
      $region34: #{tpu_custom_call.1} parent=5 // pred_check_branch
        %219 = sbr.rel (%p217) target = $region36
      $region35: #{tpu_custom_call.1} parent=5 // pred_region
        // Predicated region
        $region37: #{tpu_custom_call.1} parent=35 // pred_check
          %p220 = pneg %p39
        $region38: #{tpu_custom_call.1} parent=35 // pred_check_branch
          %222 = sbr.rel (%p220) target = $region40
        $region39: #{tpu_custom_call.1} parent=35 // pred_region
          %s223 = sand.u32 %s29, 1
          %s224 = scalar_lea.sflag [#allocation5], %s223
          %s225 = sand.u32 %s29, 1
          %s226 = smul.addr %s225, 16
          %s227 = scalar_lea.vmem [#allocation4], %s226
          %s229 = ssub.s32 256, 256
          %230 = vsyncadd %s224, %s229
          %s231 = smul.addr %s19, 2
          %s232 = smul.addr %s231, 128
          %s233 = scalar_lea.hbm %s0, %s232
          %s235 = sshll.u32 %s227, 4
          %s236 = int_to_ptr.vmem [resolvable:$true] %s235
          %238 = dma.hbm_to_vmem [thread:$0]  %s233, 256, %s236, %s224
        $region40: #{tpu_custom_call.1} parent=35 // pred_fallthru
          _
      $region36: #{tpu_custom_call.1} parent=5 // pred_fallthru
        _
      %p239 = scmp.le.s32.totalorder 1, %s19
      %p240 = scmp.lt.s32.totalorder %s19, 3
      %p241 = pnand %p239, %p240
      %p242 = pneg %p241
      // Predicated region
      $region41: #{tpu_custom_call.1} parent=5 // pred_check
        _
      $region42: #{tpu_custom_call.1} parent=5 // pred_check_branch
        %244 = sbr.rel (%p241) target = $region44
      $region43: #{tpu_custom_call.1} parent=5 // pred_region
        %s245 = ssub.s32 %s19, 1
        %s246 = sand.u32 %s32, 1
        %s247 = scalar_lea.sflag [#allocation5], %s246
        %s248 = sand.u32 %s32, 1
        %s249 = smul.addr %s248, 16
        %s250 = scalar_lea.vmem [#allocation4], %s249
        // Predicated region
        $region45: #{tpu_custom_call.1} parent=43 // pred_check
          %p251 = pneg %p45
        $region46: #{tpu_custom_call.1} parent=43 // pred_check_branch
          %253 = sbr.rel (%p251) target = $region48
        $region47: #{tpu_custom_call.1} parent=43 // pred_region
          %254 = dma.done %s247, 256
        $region48: #{tpu_custom_call.1} parent=43 // pred_fallthru
          _
        // Predicated region
        $region49: #{tpu_custom_call.1} parent=43 // pred_check
          %p255 = pneg %p66
        $region50: #{tpu_custom_call.1} parent=43 // pred_check_branch
          %257 = sbr.rel (%p255) target = $region52
        $region51: #{tpu_custom_call.1} parent=43 // pred_region
          %258 = dma.done [#allocation8], 512
        $region52: #{tpu_custom_call.1} parent=43 // pred_fallthru
          _
        %s259 = sand.u32 %s32, 1
        %s260 = scalar_lea.sflag [#allocation5], %s259
        %s261 = sand.u32 %s32, 1
        %s262 = smul.addr %s261, 16
        %s263 = scalar_lea.vmem [#allocation4], %s262
        %p264 = pneg %p45
        %p265 = pneg %p42
        %p266 = pneg %p66
        %p267 = pneg %p63
        %p268 = pneg %p87
        %p269 = pneg %p84
        %p270 = pneg %p108
        %p271 = pneg %p105
        %p272 = pneg %p129
        %p273 = pneg %p126
        %p274 = pneg %p150
        %p275 = pneg %p147
        %p276 = pneg %p176
        %p277 = pneg %p173
        %s278 = sand.u32 %s163, 1
        %s279 = scalar_lea.sflag [#allocation6], %s278
        %s280 = sand.u32 %s163, 1
        %s281 = smul.addr %s280, 16
        %s282 = scalar_lea.vmem [#allocation9], %s281
        %v284 = vld [vmem:[%s250] sm:$0xff]
        %v285 = vld [vmem:[%s250 + $0x8] sm:$0xff]
        %286 = vrot.lane.b32.xlu0 %v284, 17
        %v287 = vpop.permute.xlu0 %286
        %288 = vrot.lane.b32.xlu0 %v285, 17
        %v289 = vpop.permute.xlu0 %288
        %v290 = vlaneseq
        %v291 = vand.u32 %v290, 127
        %vm292 = vcmp.lt.s32.totalorder %v291, 17
        %v293 = vsel %vm292, %v287, %v289
        %v294 = vsel %vm292, %v289, %v287
        %v295 = vld [vmem:[#allocation7] ss:$8 sm:$0x3]
        %v297 = vlaneseq
        %v298 = vshrl.u32 %v297, 7
        %v299 = vsub.s32 0, %v298
        %v300 = vrot.slane %v295, %v299
        %v301 = vlaneseq
        %v302 = vshrl.u32 %v301, 7
        %v303 = vsub.s32 1, %v302
        %v304 = vrot.slane %v295, %v303
        %v307 = vmul.f32 %v294, %v300
        %v308 = vmul.f32 %v293, %v304
        %309 = vst [vmem:[#allocation2] sm:$0xff] %v307
        %310 = vst [vmem:[#allocation2 + $0x8] sm:$0xff] %v308
        %311 = vrot.lane.b32.xlu0 %v284, 16
        %v312 = vpop.permute.xlu0 %311
        %313 = vrot.lane.b32.xlu0 %v285, 16
        %v314 = vpop.permute.xlu0 %313
        %vm315 = vcmp.lt.s32.totalorder %v291, 16
        %v316 = vsel %vm315, %v312, %v314
        %v317 = vsel %vm315, %v314, %v312
        %s318 = scalar_lea.vmem [#allocation7], 1
        %v319 = vld [vmem:[%s318] ss:$8 sm:$0x3]
        %v321 = vlaneseq
        %v322 = vshrl.u32 %v321, 7
        %v323 = vsub.s32 0, %v322
        %v324 = vrot.slane %v319, %v323
        %v325 = vlaneseq
        %v326 = vshrl.u32 %v325, 7
        %v327 = vsub.s32 1, %v326
        %v328 = vrot.slane %v319, %v327
        %v331 = vmul.f32 %v317, %v324
        %v332 = vmul.f32 %v316, %v328
        %333 = vst [vmem:[#allocation2 + $0x10] sm:$0xff] %v331
        %334 = vst [vmem:[#allocation2 + $0x18] sm:$0xff] %v332
        %335 = vrot.lane.b32.xlu0 %v284, 15
        %v336 = vpop.permute.xlu0 %335
        %337 = vrot.lane.b32.xlu0 %v285, 15
        %v338 = vpop.permute.xlu0 %337
        %vm339 = vcmp.lt.s32.totalorder %v291, 15
        %v340 = vsel %vm339, %v336, %v338
        %v341 = vsel %vm339, %v338, %v336
        %s342 = scalar_lea.vmem [#allocation7], 2
        %v343 = vld [vmem:[%s342] ss:$8 sm:$0x3]
        %v345 = vlaneseq
        %v346 = vshrl.u32 %v345, 7
        %v347 = vsub.s32 0, %v346
        %v348 = vrot.slane %v343, %v347
        %v349 = vlaneseq
        %v350 = vshrl.u32 %v349, 7
        %v351 = vsub.s32 1, %v350
        %v352 = vrot.slane %v343, %v351
        %v355 = vmul.f32 %v341, %v348
        %v356 = vmul.f32 %v340, %v352
        %357 = vst [vmem:[#allocation2 + $0x20] sm:$0xff] %v355
        %358 = vst [vmem:[#allocation2 + $0x28] sm:$0xff] %v356
        %359 = vrot.lane.b32.xlu0 %v284, 1
        %v360 = vpop.permute.xlu0 %359
        %361 = vrot.lane.b32.xlu0 %v285, 1
        %v362 = vpop.permute.xlu0 %361
        %vm363 = vcmp.lt.s32.totalorder %v291, 1
        %v364 = vsel %vm363, %v360, %v362
        %v365 = vsel %vm363, %v362, %v360
        %s366 = scalar_lea.vmem [#allocation7], 3
        %v367 = vld [vmem:[%s366] ss:$8 sm:$0x3]
        %v369 = vlaneseq
        %v370 = vshrl.u32 %v369, 7
        %v371 = vsub.s32 0, %v370
        %v372 = vrot.slane %v367, %v371
        %v373 = vlaneseq
        %v374 = vshrl.u32 %v373, 7
        %v375 = vsub.s32 1, %v374
        %v376 = vrot.slane %v367, %v375
        %v379 = vmul.f32 %v365, %v372
        %v380 = vmul.f32 %v364, %v376
        %381 = vst [vmem:[#allocation2 + $0x30] sm:$0xff] %v379
        %382 = vst [vmem:[#allocation2 + $0x38] sm:$0xff] %v380
        %383 = vst [vmem:[#allocation2 + $0x40] sm:$0xff] %v284
        %384 = vst [vmem:[#allocation2 + $0x48] sm:$0xff] %v285
        %385 = vrot.lane.b32.xlu0 %v284, 127
        %v386 = vpop.permute.xlu0 %385
        %387 = vrot.lane.b32.xlu0 %v285, 127
        %v388 = vpop.permute.xlu0 %387
        %vm389 = vcmp.lt.s32.totalorder %v291, 127
        %v390 = vsel %vm389, %v386, %v388
        %v391 = vsel %vm389, %v388, %v386
        %s392 = scalar_lea.vmem [#allocation7], 5
        %v393 = vld [vmem:[%s392] ss:$8 sm:$0x3]
        %v395 = vlaneseq
        %v396 = vshrl.u32 %v395, 7
        %v397 = vsub.s32 0, %v396
        %v398 = vrot.slane %v393, %v397
        %v399 = vlaneseq
        %v400 = vshrl.u32 %v399, 7
        %v401 = vsub.s32 1, %v400
        %v402 = vrot.slane %v393, %v401
        %v405 = vmul.f32 %v390, %v398
        %v406 = vmul.f32 %v391, %v402
        %407 = vst [vmem:[#allocation2 + $0x50] sm:$0xff] %v405
        %408 = vst [vmem:[#allocation2 + $0x58] sm:$0xff] %v406
        %409 = vrot.lane.b32.xlu0 %v284, 113
        %v410 = vpop.permute.xlu0 %409
        %411 = vrot.lane.b32.xlu0 %v285, 113
        %v412 = vpop.permute.xlu0 %411
        %vm413 = vcmp.lt.s32.totalorder %v291, 113
        %v414 = vsel %vm413, %v410, %v412
        %v415 = vsel %vm413, %v412, %v410
        %s416 = scalar_lea.vmem [#allocation7], 6
        %v417 = vld [vmem:[%s416] ss:$8 sm:$0x3]
        %v419 = vlaneseq
        %v420 = vshrl.u32 %v419, 7
        %v421 = vsub.s32 0, %v420
        %v422 = vrot.slane %v417, %v421
        %v423 = vlaneseq
        %v424 = vshrl.u32 %v423, 7
        %v425 = vsub.s32 1, %v424
        %v426 = vrot.slane %v417, %v425
        %v429 = vmul.f32 %v414, %v422
        %v430 = vmul.f32 %v415, %v426
        %431 = vst [vmem:[#allocation2 + $0x60] sm:$0xff] %v429
        %432 = vst [vmem:[#allocation2 + $0x68] sm:$0xff] %v430
        %433 = vrot.lane.b32.xlu0 %v284, 112
        %v434 = vpop.permute.xlu0 %433
        %435 = vrot.lane.b32.xlu0 %v285, 112
        %v436 = vpop.permute.xlu0 %435
        %vm437 = vcmp.lt.s32.totalorder %v291, 112
        %v438 = vsel %vm437, %v434, %v436
        %v439 = vsel %vm437, %v436, %v434
        %s440 = scalar_lea.vmem [#allocation7], 7
        %v441 = vld [vmem:[%s440] ss:$8 sm:$0x3]
        %v443 = vlaneseq
        %v444 = vshrl.u32 %v443, 7
        %v445 = vsub.s32 0, %v444
        %v446 = vrot.slane %v441, %v445
        %v447 = vlaneseq
        %v448 = vshrl.u32 %v447, 7
        %v449 = vsub.s32 1, %v448
        %v450 = vrot.slane %v441, %v449
        %v453 = vmul.f32 %v438, %v446
        %v454 = vmul.f32 %v439, %v450
        %455 = vst [vmem:[#allocation2 + $0x70] sm:$0xff] %v453
        %456 = vst [vmem:[#allocation2 + $0x78] sm:$0xff] %v454
        %457 = vrot.lane.b32.xlu0 %v284, 111
        %v458 = vpop.permute.xlu0 %457
        %459 = vrot.lane.b32.xlu0 %v285, 111
        %v460 = vpop.permute.xlu0 %459
        %vm461 = vcmp.lt.s32.totalorder %v291, 111
        %v462 = vsel %vm461, %v458, %v460
        %v463 = vsel %vm461, %v460, %v458
        %s464 = scalar_lea.vmem [#allocation7], 16
        %v465 = vld [vmem:[%s464] ss:$8 sm:$0x3]
        %v467 = vlaneseq
        %v468 = vshrl.u32 %v467, 7
        %v469 = vsub.s32 0, %v468
        %v470 = vrot.slane %v465, %v469
        %v471 = vlaneseq
        %v472 = vshrl.u32 %v471, 7
        %v473 = vsub.s32 1, %v472
        %v474 = vrot.slane %v465, %v473
        %v477 = vmul.f32 %v462, %v470
        %v478 = vmul.f32 %v463, %v474
        %479 = vst [vmem:[#allocation2 + $0x80] sm:$0xff] %v477
        %480 = vst [vmem:[#allocation2 + $0x88] sm:$0xff] %v478
        %v481 = vld [vmem:[%s2] sm:$0xf]
        %v482 = vld [vmem:[#allocation2] sm:$0xff]
        %v483 = vld [vmem:[#allocation2 + $0x8] sm:$0xff]
        %v484 = vld [vmem:[#allocation2 + $0x10] sm:$0xff]
        %v485 = vld [vmem:[#allocation2 + $0x18] sm:$0xff]
        %v486 = vld [vmem:[#allocation2 + $0x20] sm:$0xff]
        %v487 = vld [vmem:[#allocation2 + $0x28] sm:$0xff]
        %v488 = vld [vmem:[#allocation2 + $0x30] sm:$0xff]
        %v489 = vld [vmem:[#allocation2 + $0x38] sm:$0xff]
        %v490 = vld [vmem:[#allocation2 + $0x40] sm:$0xff]
        %v491 = vld [vmem:[#allocation2 + $0x48] sm:$0xff]
        %v492 = vld [vmem:[#allocation2 + $0x50] sm:$0xff]
        %v493 = vld [vmem:[#allocation2 + $0x58] sm:$0xff]
        %v494 = vld [vmem:[#allocation2 + $0x60] sm:$0xff]
        %v495 = vld [vmem:[#allocation2 + $0x68] sm:$0xff]
        %v496 = vld [vmem:[#allocation2 + $0x70] sm:$0xff]
        %v497 = vld [vmem:[#allocation2 + $0x78] sm:$0xff]
        %v498 = vld [vmem:[#allocation2 + $0x80] sm:$0xff]
        %v499 = vld [vmem:[#allocation2 + $0x88] sm:$0xff]
        %v500 = vpack.c.bf16 %v484, %v482
        %v501 = vpack.c.bf16 %v485, %v483
        %v502 = vpack.c.bf16 %v488, %v486
        %v503 = vpack.c.bf16 %v489, %v487
        %v504 = vpack.c.bf16 %v492, %v490
        %v505 = vpack.c.bf16 %v493, %v491
        %v506 = vpack.c.bf16 %v496, %v494
        %v507 = vpack.c.bf16 %v497, %v495
        %v508 = vpack.c.bf16 %v498, %v498
        %v509 = vpack.c.bf16 %v499, %v499
        %v510 = vld [vmem:[%s3] sm:$0xff]
        %512 = vset.pattern.permute.xlu0 0
        %513 = vperm.xlu0 %512, %v510
        %v514 = vpop.permute.xlu0 %513
        %vm516 = vcmask 588800
        %v518 = vsel %vm516, %v481, 0
        %vm520 = vcmask 1043456
        %v522 = vsel %vm520, %v508, 0
        %v525 = vsel %vm520, %v509, 0
        %527 = vmatprep.subr.bf16.mxu0 %v501
        %528 = vmatpush1.bf16.msra.mxu0 %v500
        %529 = vmatprep.subr.bf16.mxu0 %v503
        %530 = vmatpush1.bf16.msra.mxu0 %v502
        %531 = vmatprep.subr.bf16.mxu0 %v505
        %532 = vmatpush1.bf16.msra.mxu0 %v504
        %533 = vmatprep.subr.bf16.mxu0 %v507
        %534 = vmatpush1.bf16.msra.mxu0 %v506
        %535 = vmatprep.subr.bf16.mxu0 %v525
        %536 = vmatpush1.bf16.msra.mxu0 %v522
        %537 = vmatprep.subr.bf16.mxu0 0
        %538 = vmatpush1.bf16.msra.mxu0 0
        %539 = vmatprep.subr.bf16.mxu0 0
        %540 = vmatpush1.bf16.msra.mxu0 0
        %541 = vmatprep.subr.bf16.mxu0 0
        %542 = vmatpush1.bf16.msra.mxu0 0
        %543 = vmatprep.subr.bf16.mxu0 0
        %544 = vmatpush1.bf16.msra.mxu0 0
        %545 = vmatprep.subr.bf16.mxu0 0
        %546 = vmatpush1.bf16.msra.mxu0 0
        %547 = vmatprep.subr.bf16.mxu0 0
        %548 = vmatpush1.bf16.msra.mxu0 0
        %549 = vmatprep.subr.bf16.mxu0 0
        %550 = vmatpush1.bf16.msra.mxu0 0
        %551 = vmatprep.subr.bf16.mxu0 0
        %552 = vmatpush1.bf16.msra.mxu0 0
        %553 = vmatprep.subr.bf16.mxu0 0
        %554 = vmatpush1.bf16.msra.mxu0 0
        %555 = vmatprep.subr.bf16.mxu0 0
        %556 = vmatpush1.bf16.msra.mxu0 0
        %557 = vmatprep.subr.bf16.mxu0 0
        %558 = vmatpush1.bf16.msra.mxu0 0
        %559 = vmatprep.mubr.bf16.mxu0 0
        %560 = vmatmul.mubr.bf16.gmra.mrb[0].mxu0 %v518
        %v561 = vpop.f32.mrb[0].mxu0
        %v562 = vadd.f32 %v514, %v561
        %v563 = vpop.f32.mrb[0].mxu0
        %v564 = vadd.f32 %v514, %v563
        %v565 = vpop.f32.mrb[0].mxu0
        %v566 = vpop.f32.mrb[0].mxu0
        %567 = vdwg.mxu0
        %v568 = vmax.f32 %v562, 0.0
        %v569 = vmax.f32 %v564, 0.0
        %570 = vrot.lane.b32.xlu0 %v568, 17
        %v571 = vpop.permute.xlu0 %570
        %572 = vrot.lane.b32.xlu0 %v569, 17
        %v573 = vpop.permute.xlu0 %572
        %v574 = vsel %vm292, %v571, %v573
        %v575 = vsel %vm292, %v573, %v571
        %v576 = vld [vmem:[#allocation7] ss:$8 sm:$0x3]
        %v578 = vlaneseq
        %v579 = vshrl.u32 %v578, 7
        %v580 = vsub.s32 0, %v579
        %v581 = vrot.slane %v576, %v580
        %v582 = vlaneseq
        %v583 = vshrl.u32 %v582, 7
        %v584 = vsub.s32 1, %v583
        %v585 = vrot.slane %v576, %v584
        %v588 = vmul.f32 %v575, %v581
        %v589 = vmul.f32 %v574, %v585
        %590 = vst [vmem:[#allocation3] sm:$0xff] %v588
        %591 = vst [vmem:[#allocation3 + $0x8] sm:$0xff] %v589
        %592 = vrot.lane.b32.xlu0 %v568, 16
        %v593 = vpop.permute.xlu0 %592
        %594 = vrot.lane.b32.xlu0 %v569, 16
        %v595 = vpop.permute.xlu0 %594
        %v596 = vsel %vm315, %v593, %v595
        %v597 = vsel %vm315, %v595, %v593
        %v598 = vld [vmem:[%s318] ss:$8 sm:$0x3]
        %v600 = vlaneseq
        %v601 = vshrl.u32 %v600, 7
        %v602 = vsub.s32 0, %v601
        %v603 = vrot.slane %v598, %v602
        %v604 = vlaneseq
        %v605 = vshrl.u32 %v604, 7
        %v606 = vsub.s32 1, %v605
        %v607 = vrot.slane %v598, %v606
        %v610 = vmul.f32 %v597, %v603
        %v611 = vmul.f32 %v596, %v607
        %612 = vst [vmem:[#allocation3 + $0x10] sm:$0xff] %v610
        %613 = vst [vmem:[#allocation3 + $0x18] sm:$0xff] %v611
        %614 = vrot.lane.b32.xlu0 %v568, 15
        %v615 = vpop.permute.xlu0 %614
        %616 = vrot.lane.b32.xlu0 %v569, 15
        %v617 = vpop.permute.xlu0 %616
        %v618 = vsel %vm339, %v615, %v617
        %v619 = vsel %vm339, %v617, %v615
        %v620 = vld [vmem:[%s342] ss:$8 sm:$0x3]
        %v622 = vlaneseq
        %v623 = vshrl.u32 %v622, 7
        %v624 = vsub.s32 0, %v623
        %v625 = vrot.slane %v620, %v624
        %v626 = vlaneseq
        %v627 = vshrl.u32 %v626, 7
        %v628 = vsub.s32 1, %v627
        %v629 = vrot.slane %v620, %v628
        %v632 = vmul.f32 %v619, %v625
        %v633 = vmul.f32 %v618, %v629
        %634 = vst [vmem:[#allocation3 + $0x20] sm:$0xff] %v632
        %635 = vst [vmem:[#allocation3 + $0x28] sm:$0xff] %v633
        %636 = vrot.lane.b32.xlu0 %v568, 1
        %v637 = vpop.permute.xlu0 %636
        %638 = vrot.lane.b32.xlu0 %v569, 1
        %v639 = vpop.permute.xlu0 %638
        %v640 = vsel %vm363, %v637, %v639
        %v641 = vsel %vm363, %v639, %v637
        %v642 = vld [vmem:[%s366] ss:$8 sm:$0x3]
        %v644 = vlaneseq
        %v645 = vshrl.u32 %v644, 7
        %v646 = vsub.s32 0, %v645
        %v647 = vrot.slane %v642, %v646
        %v648 = vlaneseq
        %v649 = vshrl.u32 %v648, 7
        %v650 = vsub.s32 1, %v649
        %v651 = vrot.slane %v642, %v650
        %v654 = vmul.f32 %v641, %v647
        %v655 = vmul.f32 %v640, %v651
        %656 = vst [vmem:[#allocation3 + $0x30] sm:$0xff] %v654
        %657 = vst [vmem:[#allocation3 + $0x38] sm:$0xff] %v655
        %658 = vst [vmem:[#allocation3 + $0x40] sm:$0xff] %v568
        %659 = vst [vmem:[#allocation3 + $0x48] sm:$0xff] %v569
        %660 = vrot.lane.b32.xlu0 %v568, 127
        %v661 = vpop.permute.xlu0 %660
        %662 = vrot.lane.b32.xlu0 %v569, 127
        %v663 = vpop.permute.xlu0 %662
        %v664 = vsel %vm389, %v661, %v663
        %v665 = vsel %vm389, %v663, %v661
        %v666 = vld [vmem:[%s392] ss:$8 sm:$0x3]
        %v668 = vlaneseq
        %v669 = vshrl.u32 %v668, 7
        %v670 = vsub.s32 0, %v669
        %v671 = vrot.slane %v666, %v670
        %v672 = vlaneseq
        %v673 = vshrl.u32 %v672, 7
        %v674 = vsub.s32 1, %v673
        %v675 = vrot.slane %v666, %v674
        %v678 = vmul.f32 %v664, %v671
        %v679 = vmul.f32 %v665, %v675
        %680 = vst [vmem:[#allocation3 + $0x50] sm:$0xff] %v678
        %681 = vst [vmem:[#allocation3 + $0x58] sm:$0xff] %v679
        %682 = vrot.lane.b32.xlu0 %v568, 113
        %v683 = vpop.permute.xlu0 %682
        %684 = vrot.lane.b32.xlu0 %v569, 113
        %v685 = vpop.permute.xlu0 %684
        %v686 = vsel %vm413, %v683, %v685
        %v687 = vsel %vm413, %v685, %v683
        %v688 = vld [vmem:[%s416] ss:$8 sm:$0x3]
        %v690 = vlaneseq
        %v691 = vshrl.u32 %v690, 7
        %v692 = vsub.s32 0, %v691
        %v693 = vrot.slane %v688, %v692
        %v694 = vlaneseq
        %v695 = vshrl.u32 %v694, 7
        %v696 = vsub.s32 1, %v695
        %v697 = vrot.slane %v688, %v696
        %v700 = vmul.f32 %v686, %v693
        %v701 = vmul.f32 %v687, %v697
        %702 = vst [vmem:[#allocation3 + $0x60] sm:$0xff] %v700
        %703 = vst [vmem:[#allocation3 + $0x68] sm:$0xff] %v701
        %704 = vrot.lane.b32.xlu0 %v568, 112
        %v705 = vpop.permute.xlu0 %704
        %706 = vrot.lane.b32.xlu0 %v569, 112
        %v707 = vpop.permute.xlu0 %706
        %v708 = vsel %vm437, %v705, %v707
        %v709 = vsel %vm437, %v707, %v705
        %v710 = vld [vmem:[%s440] ss:$8 sm:$0x3]
        %v712 = vlaneseq
        %v713 = vshrl.u32 %v712, 7
        %v714 = vsub.s32 0, %v713
        %v715 = vrot.slane %v710, %v714
        %v716 = vlaneseq
        %v717 = vshrl.u32 %v716, 7
        %v718 = vsub.s32 1, %v717
        %v719 = vrot.slane %v710, %v718
        %v722 = vmul.f32 %v708, %v715
        %v723 = vmul.f32 %v709, %v719
        %724 = vst [vmem:[#allocation3 + $0x70] sm:$0xff] %v722
        %725 = vst [vmem:[#allocation3 + $0x78] sm:$0xff] %v723
        %726 = vrot.lane.b32.xlu0 %v568, 111
        %v727 = vpop.permute.xlu0 %726
        %728 = vrot.lane.b32.xlu0 %v569, 111
        %v729 = vpop.permute.xlu0 %728
        %v730 = vsel %vm461, %v727, %v729
        %v731 = vsel %vm461, %v729, %v727
        %v732 = vld [vmem:[%s464] ss:$8 sm:$0x3]
        %v734 = vlaneseq
        %v735 = vshrl.u32 %v734, 7
        %v736 = vsub.s32 0, %v735
        %v737 = vrot.slane %v732, %v736
        %v738 = vlaneseq
        %v739 = vshrl.u32 %v738, 7
        %v740 = vsub.s32 1, %v739
        %v741 = vrot.slane %v732, %v740
        %v744 = vmul.f32 %v730, %v737
        %v745 = vmul.f32 %v731, %v741
        %746 = vst [vmem:[#allocation3 + $0x80] sm:$0xff] %v744
        %747 = vst [vmem:[#allocation3 + $0x88] sm:$0xff] %v745
        %748 = vst [vmem:[#allocation3 + $0x90] sm:$0xff] %v284
        %749 = vst [vmem:[#allocation3 + $0x98] sm:$0xff] %v285
        %v750 = vld [vmem:[%s4] sm:$0xf]
        %v751 = vld [vmem:[#allocation3] sm:$0xff]
        %v752 = vld [vmem:[#allocation3 + $0x8] sm:$0xff]
        %v753 = vld [vmem:[#allocation3 + $0x10] sm:$0xff]
        %v754 = vld [vmem:[#allocation3 + $0x18] sm:$0xff]
        %v755 = vld [vmem:[#allocation3 + $0x20] sm:$0xff]
        %v756 = vld [vmem:[#allocation3 + $0x28] sm:$0xff]
        %v757 = vld [vmem:[#allocation3 + $0x30] sm:$0xff]
        %v758 = vld [vmem:[#allocation3 + $0x38] sm:$0xff]
        %v759 = vld [vmem:[#allocation3 + $0x40] sm:$0xff]
        %v760 = vld [vmem:[#allocation3 + $0x48] sm:$0xff]
        %v761 = vld [vmem:[#allocation3 + $0x50] sm:$0xff]
        %v762 = vld [vmem:[#allocation3 + $0x58] sm:$0xff]
        %v763 = vld [vmem:[#allocation3 + $0x60] sm:$0xff]
        %v764 = vld [vmem:[#allocation3 + $0x68] sm:$0xff]
        %v765 = vld [vmem:[#allocation3 + $0x70] sm:$0xff]
        %v766 = vld [vmem:[#allocation3 + $0x78] sm:$0xff]
        %v767 = vld [vmem:[#allocation3 + $0x80] sm:$0xff]
        %v768 = vld [vmem:[#allocation3 + $0x88] sm:$0xff]
        %v769 = vld [vmem:[#allocation3 + $0x90] sm:$0xff]
        %v770 = vld [vmem:[#allocation3 + $0x98] sm:$0xff]
        %v771 = vpack.c.bf16 %v753, %v751
        %v772 = vpack.c.bf16 %v754, %v752
        %v773 = vpack.c.bf16 %v757, %v755
        %v774 = vpack.c.bf16 %v758, %v756
        %v775 = vpack.c.bf16 %v761, %v759
        %v776 = vpack.c.bf16 %v762, %v760
        %v777 = vpack.c.bf16 %v765, %v763
        %v778 = vpack.c.bf16 %v766, %v764
        %v779 = vpack.c.bf16 %v769, %v767
        %v780 = vpack.c.bf16 %v770, %v768
        %v781 = vld [vmem:[%s5] sm:$0xff]
        %783 = vset.pattern.permute.xlu0 0
        %784 = vperm.xlu0 %783, %v781
        %v785 = vpop.permute.xlu0 %784
        %vm787 = vcmask 654336
        %v789 = vsel %vm787, %v750, 0
        %791 = vmatprep.subr.bf16.mxu0 %v772
        %792 = vmatpush1.bf16.msra.mxu0 %v771
        %793 = vmatprep.subr.bf16.mxu0 %v774
        %794 = vmatpush1.bf16.msra.mxu0 %v773
        %795 = vmatprep.subr.bf16.mxu0 %v776
        %796 = vmatpush1.bf16.msra.mxu0 %v775
        %797 = vmatprep.subr.bf16.mxu0 %v778
        %798 = vmatpush1.bf16.msra.mxu0 %v777
        %799 = vmatprep.subr.bf16.mxu0 %v780
        %800 = vmatpush1.bf16.msra.mxu0 %v779
        %801 = vmatprep.subr.bf16.mxu0 0
        %802 = vmatpush1.bf16.msra.mxu0 0
        %803 = vmatprep.subr.bf16.mxu0 0
        %804 = vmatpush1.bf16.msra.mxu0 0
        %805 = vmatprep.subr.bf16.mxu0 0
        %806 = vmatpush1.bf16.msra.mxu0 0
        %807 = vmatprep.subr.bf16.mxu0 0
        %808 = vmatpush1.bf16.msra.mxu0 0
        %809 = vmatprep.subr.bf16.mxu0 0
        %810 = vmatpush1.bf16.msra.mxu0 0
        %811 = vmatprep.subr.bf16.mxu0 0
        %812 = vmatpush1.bf16.msra.mxu0 0
        %813 = vmatprep.subr.bf16.mxu0 0
        %814 = vmatpush1.bf16.msra.mxu0 0
        %815 = vmatprep.subr.bf16.mxu0 0
        %816 = vmatpush1.bf16.msra.mxu0 0
        %817 = vmatprep.subr.bf16.mxu0 0
        %818 = vmatpush1.bf16.msra.mxu0 0
        %819 = vmatprep.subr.bf16.mxu0 0
        %820 = vmatpush1.bf16.msra.mxu0 0
        %821 = vmatprep.subr.bf16.mxu0 0
        %822 = vmatpush1.bf16.msra.mxu0 0
        %823 = vmatprep.mubr.bf16.mxu0 0
        %824 = vmatmul.mubr.bf16.gmra.mrb[0].mxu0 %v789
        %v825 = vpop.f32.mrb[0].mxu0
        %v826 = vadd.f32 %v785, %v825
        %v827 = vpop.f32.mrb[0].mxu0
        %v828 = vadd.f32 %v785, %v827
        %v829 = vpop.f32.mrb[0].mxu0
        %v830 = vpop.f32.mrb[0].mxu0
        %831 = vdwg.mxu0
        %v832 = vmax.f32 %v826, 0.0
        %v833 = vmax.f32 %v828, 0.0
        %834 = vst [vmem:[%s282] sm:$0xff] %v832
        %835 = vst [vmem:[%s282 + $0x8] sm:$0xff] %v833
        %s836 = sand.u32 %s163, 1
        %s837 = scalar_lea.sflag [#allocation6], %s836
        %s838 = sand.u32 %s163, 1
        %s839 = smul.addr %s838, 16
        %s840 = scalar_lea.vmem [#allocation9], %s839
        // Predicated region
        $region53: #{tpu_custom_call.1} parent=43 // pred_check
          %p841 = pneg %p173
        $region54: #{tpu_custom_call.1} parent=43 // pred_check_branch
          %843 = sbr.rel (%p841) target = $region56
        $region55: #{tpu_custom_call.1} parent=43 // pred_region
          %s845 = ssub.s32 256, 256
          %846 = vsyncadd %s837, %s845
          %s847 = smul.addr %s24, 2
          %s848 = smul.addr %s847, 128
          %s849 = scalar_lea.hbm %s6, %s848
          %s851 = sshll.u32 %s840, 4
          %s852 = int_to_ptr.vmem [resolvable:$true] %s851
          %854 = dma.vmem_to_hbm [thread:$0]  %s852, 256, %s849, %s837
        $region56: #{tpu_custom_call.1} parent=43 // pred_fallthru
          _
      $region44: #{tpu_custom_call.1} parent=5 // pred_fallthru
        _
      %p855 = scmp.le.s32.totalorder 2, %s19
      // Predicated region
      $region57: #{tpu_custom_call.1} parent=5 // pred_check
        %p856 = pneg %p855
      $region58: #{tpu_custom_call.1} parent=5 // pred_check_branch
        %858 = sbr.rel (%p856) target = $region60
      $region59: #{tpu_custom_call.1} parent=5 // pred_region
        %s859 = ssub.s32 %s19, 2
        // Predicated region
        $region61: #{tpu_custom_call.1} parent=59 // pred_check
          %p860 = pneg %p179
        $region62: #{tpu_custom_call.1} parent=59 // pred_check_branch
          %862 = sbr.rel (%p860) target = $region64
        $region63: #{tpu_custom_call.1} parent=59 // pred_region
          %s863 = sand.u32 %s164, 1
          %s864 = scalar_lea.sflag [#allocation6], %s863
          %s865 = sand.u32 %s164, 1
          %s866 = smul.addr %s865, 16
          %s867 = scalar_lea.vmem [#allocation9], %s866
          %868 = dma.done %s864, 256
        $region64: #{tpu_custom_call.1} parent=59 // pred_fallthru
          _
      $region60: #{tpu_custom_call.1} parent=5 // pred_fallthru
        _
    $region6: #{tpu_custom_call.1} parent=1 // loop_footer
      %s23 = sadd.s32 1, %s19
    $region7: #{tpu_custom_call.1} parent=1 // loop_footer_branch
      %18 = sbr.rel target = $region3
    $region8: #{tpu_custom_call.1} parent=1 // loop_exit
      _
    %869 = vsyncpa [#allocation5], 1
    %s870 = scalar_lea.sflag [#allocation5], 1
    %871 = vsyncpa %s870, 1
    %872 = vsyncpa [#allocation8], 1
    %873 = vsyncpa [#allocation6], 1
    %s874 = scalar_lea.sflag [#allocation6], 1
    %875 = vsyncpa %s874, 1

</llo_original>
